<compile_context>
chip_gen: v5e
topology: v5e:2x2
jax: 0.10.0
libtpu: 0.0.40
codegen_flags: <defaults>
</compile_context>

<pallas_src>
import functools

import jax
import jax.numpy as jnp
from jax.experimental import pallas as pl
from jax.experimental.pallas import tpu as pltpu

IGNORE_INDEX = -100


def _ce_kernel(pred_ref, gt_ref, sum_ref, cnt_ref, *, ignore_index, n_total, tile_n):
    i = pl.program_id(0)

    logits = pred_ref[...].astype(jnp.float32)      # (S, TN), cast in-kernel (free, VPU)
    labels = gt_ref[...]                             # (1, TN) int32

    # numerically-stable log-sum-exp over the class (sublane) axis
    m = jnp.max(logits, axis=0, keepdims=True)                                   # (1, TN)
    lse = m + jnp.log(jnp.sum(jnp.exp(logits - m), axis=0, keepdims=True))       # (1, TN)

    # gather the target-class logit via iota==label mask along the class axis
    cls = jax.lax.broadcasted_iota(jnp.int32, logits.shape, 0)                   # (S, TN)
    picked = jnp.sum(jnp.where(cls == labels, logits, 0.0), axis=0, keepdims=True)

    # mask: ragged tail (out-of-bounds lanes hold undefined data) + ignore_index.
    # Use jnp.where (not multiply) so garbage/NaN lanes are zeroed robustly.
    col = i * tile_n + jax.lax.broadcasted_iota(jnp.int32, labels.shape, 1)      # (1, TN)
    valid = jnp.logical_and(col < n_total, labels != ignore_index)

    per_point = jnp.where(valid, lse - picked, 0.0)   # -log p[label], masked

    sum_ref[...] = jnp.sum(per_point).reshape(1, 1, 1)
    cnt_ref[...] = jnp.sum(valid.astype(jnp.float32)).reshape(1, 1, 1)


def segmentation_loss(pred, gt, *, ignore_index=IGNORE_INDEX,
                      target_block_bytes=2 * 1024 * 1024):
    """Matches F.cross_entropy(pred, gt, ignore_index=..., reduction='mean')."""
    # TODO(synk): per-class `weight` (module default None) is not implemented.
    # Same reshape semantics as the PyTorch module.
    if pred.ndim > 2:
        pred = pred.reshape(-1, pred.shape[-1])
    gt = gt.reshape(-1)

    n, s = pred.shape

    # Lane-dense layout: classes on sublanes, points on lanes.  In a real model the
    # producer should emit (S, N) directly / fuse this transpose; standalone we pay
    # one XLA transpose here.  Keep pred in its native dtype (no wrapper astype).
    pred_t = pred.T                                   # (S, N)
    gt2 = gt.reshape(1, -1).astype(jnp.int32)         # (1, N)

    # Tile size: a few MiB of pred per block (amortizes ~0.35 us/step), multiple of
    # 128 lanes, clipped to N rounded up to a lane multiple.  No jnp.pad of pred:
    # the ragged tail is masked inside the kernel.
    itemsize = jnp.dtype(pred.dtype).itemsize
    tile_n = max(128, (target_block_bytes // (s * itemsize)) // 128 * 128)
    n_up = ((n + 127) // 128) * 128
    tile_n = min(tile_n, n_up)
    grid_n = pl.cdiv(n, tile_n)

    kernel = functools.partial(_ce_kernel, ignore_index=ignore_index,
                               n_total=n, tile_n=tile_n)

    sums, cnts = pl.pallas_call(
        kernel,
        out_shape=(jax.ShapeDtypeStruct((grid_n, 1, 1), jnp.float32),
                   jax.ShapeDtypeStruct((grid_n, 1, 1), jnp.float32)),
        grid_spec=pltpu.PrefetchScalarGridSpec(
            num_scalar_prefetch=0,
            grid=(grid_n,),
            in_specs=[
                pl.BlockSpec((s, tile_n), lambda i: (0, i)),   # pred (S, N)
                pl.BlockSpec((1, tile_n), lambda i: (0, i)),   # gt   (1, N)
            ],
            out_specs=[
                pl.BlockSpec((1, 1, 1), lambda i: (i, 0, 0)),  # per-tile loss sum
                pl.BlockSpec((1, 1, 1), lambda i: (i, 0, 0)),  # per-tile valid count
            ],
        ),
        compiler_params=pltpu.CompilerParams(
            dimension_semantics=("parallel",),        # independent tiles -> megacore OK
            vmem_limit_bytes=32 * 1024 * 1024),       # explicit budget (v5e/v6e/v7x safe)
    )(pred_t, gt2)

    # Tiny final reduction in the wrapper.  If every label is ignore_index the
    # count is 0 and this returns NaN, matching PyTorch semantics.
    return jnp.sum(sums) / jnp.sum(cnts)


def _reference_loss(pred, gt, ignore_index=IGNORE_INDEX):
    # pure-JAX reference of F.cross_entropy(..., reduction='mean', ignore_index)
    if pred.ndim > 2:
        pred = pred.reshape(-1, pred.shape[-1])
    gt = gt.reshape(-1)
    valid = gt != ignore_index
    safe_gt = jnp.where(valid, gt, 0)
    logp = jax.nn.log_softmax(pred.astype(jnp.float32), axis=-1)
    nll = -jnp.take_along_axis(logp, safe_gt[:, None], axis=-1)[:, 0]
    nll = jnp.where(valid, nll, 0.0)
    return jnp.sum(nll) / jnp.sum(valid.astype(jnp.float32))


if __name__ == "__main__":
    key = jax.random.PRNGKey(0)
    k1, k2, k3 = jax.random.split(key, 3)

    # main case: pred (B, P, S) -> n = 256 points, S = 8 classes
    B, P, S = 2, 128, 8
    pred = jax.random.normal(k1, (B, P, S), dtype=jnp.float32)
    gt = jax.random.randint(k2, (B, P), 0, S, dtype=jnp.int32)
    drop = jax.random.uniform(k3, (B, P)) < 0.1          # sprinkle ignored points
    gt = jnp.where(drop, jnp.int32(IGNORE_INDEX), gt)

    loss = segmentation_loss(pred, gt)
    loss = jax.block_until_ready(loss)
    ref = _reference_loss(pred, gt)
    assert jnp.allclose(loss, ref, atol=1e-5, rtol=1e-5), (loss, ref)

    # ragged case (n not a multiple of 128): exercises the in-kernel tail mask
    k4, k5 = jax.random.split(k1)
    pred2 = jax.random.normal(k4, (77, S), dtype=jnp.float32)
    gt2 = jax.random.randint(k5, (77,), 0, S, dtype=jnp.int32)
    gt2 = gt2.at[::13].set(IGNORE_INDEX)
    loss2 = jax.block_until_ready(segmentation_loss(pred2, gt2))
    ref2 = _reference_loss(pred2, gt2)
    assert jnp.allclose(loss2, ref2, atol=1e-5, rtol=1e-5), (loss2, ref2)

    print("KERNEL_OK")
</pallas_src>

<mosaic_0001>
module attributes {stable_mosaic.version = 11 : i64} {
  func.func @_ce_kernel(%arg0: i32, %arg1: memref<8x256xf32, #tpu.memory_space<vmem>>, %arg2: memref<1x256xi32, #tpu.memory_space<vmem>>, %arg3: memref<1x1x1xf32, #tpu.memory_space<vmem>>, %arg4: memref<1x1x1xf32, #tpu.memory_space<vmem>>) attributes {dimension_semantics = [#tpu.dimension_semantics<parallel>], iteration_bounds = array<i64: 1>, scalar_prefetch = 0 : i64, scratch_operands = 0 : i64, tpu.core_type = #tpu.core_type<tc>, window_params = [{transform_indices = @transform_0, window_bounds = array<i64: 8, 256>}, {transform_indices = @transform_1, window_bounds = array<i64: 1, 256>}, {transform_indices = @transform_2, window_bounds = array<i64: 1, 1, 1>}, {transform_indices = @transform_3, window_bounds = array<i64: 1, 1, 1>}]} {
    %c0 = arith.constant 0 : index
    %c0_0 = arith.constant 0 : index
    %0 = vector.load %arg1[%c0, %c0_0] : memref<8x256xf32, #tpu.memory_space<vmem>>, vector<8x256xf32>
    %c0_1 = arith.constant 0 : index
    %c0_2 = arith.constant 0 : index
    %1 = vector.load %arg2[%c0_1, %c0_2] : memref<1x256xi32, #tpu.memory_space<vmem>>, vector<1x256xi32>
    %cst = arith.constant dense<0xFF800000> : vector<256xf32>
    %2 = vector.multi_reduction <maximumf>, %0, %cst [0] : vector<8x256xf32> to vector<256xf32>
    %3 = vector.shape_cast %2 : vector<256xf32> to vector<1x256xf32>
    %4 = vector.broadcast %3 : vector<1x256xf32> to vector<8x256xf32>
    %5 = arith.subf %0, %4 : vector<8x256xf32>
    %6 = math.exp %5 : vector<8x256xf32>
    %cst_3 = arith.constant dense<0.000000e+00> : vector<256xf32>
    %7 = vector.multi_reduction <add>, %6, %cst_3 [0] : vector<8x256xf32> to vector<256xf32>
    %8 = vector.shape_cast %7 : vector<256xf32> to vector<1x256xf32>
    %9 = math.log %8 : vector<1x256xf32>
    %10 = arith.addf %3, %9 : vector<1x256xf32>
    %11 = tpu.iota {dimensions = array<i32: 0>} : vector<8x256xi32>
    %12 = vector.broadcast %1 : vector<1x256xi32> to vector<8x256xi32>
    %13 = arith.cmpi eq, %11, %12 : vector<8x256xi32>
    %cst_4 = arith.constant 0.000000e+00 : f32
    %14 = vector.broadcast %cst_4 : f32 to vector<8x256xf32>
    %15 = arith.select %13, %0, %14 : vector<8x256xi1>, vector<8x256xf32>
    %cst_5 = arith.constant dense<0.000000e+00> : vector<256xf32>
    %16 = vector.multi_reduction <add>, %15, %cst_5 [0] : vector<8x256xf32> to vector<256xf32>
    %17 = vector.shape_cast %16 : vector<256xf32> to vector<1x256xf32>
    %c256_i32 = arith.constant 256 : i32
    %18 = arith.muli %arg0, %c256_i32 : i32
    %19 = tpu.iota {dimensions = array<i32: 1>} : vector<1x256xi32>
    %20 = vector.broadcast %18 : i32 to vector<1x256xi32>
    %21 = arith.addi %20, %19 : vector<1x256xi32>
    %c256_i32_6 = arith.constant 256 : i32
    %22 = vector.broadcast %c256_i32_6 : i32 to vector<1x256xi32>
    %23 = arith.cmpi slt, %21, %22 : vector<1x256xi32>
    %c-100_i32 = arith.constant -100 : i32
    %24 = vector.broadcast %c-100_i32 : i32 to vector<1x256xi32>
    %25 = arith.cmpi ne, %1, %24 : vector<1x256xi32>
    %26 = arith.andi %23, %25 : vector<1x256xi1>
    %27 = arith.subf %10, %17 : vector<1x256xf32>
    %cst_7 = arith.constant 0.000000e+00 : f32
    %28 = vector.broadcast %cst_7 : f32 to vector<1x256xf32>
    %29 = arith.select %26, %27, %28 : vector<1x256xi1>, vector<1x256xf32>
    %30 = vector.shape_cast %29 : vector<1x256xf32> to vector<1x1x256xf32>
    %cst_8 = arith.constant dense<0.000000e+00> : vector<1xf32>
    %31 = vector.multi_reduction <add>, %30, %cst_8 [1, 2] : vector<1x1x256xf32> to vector<1xf32>
    %32 = vector.shape_cast %31 : vector<1xf32> to vector<1x1x1xf32>
    %33 = vector.extract %32[0, 0, 0] : f32 from vector<1x1x1xf32>
    %34 = vector.broadcast %33 : f32 to vector<1x1x1xf32>
    %c0_9 = arith.constant 0 : index
    %c0_10 = arith.constant 0 : index
    %c0_11 = arith.constant 0 : index
    %35 = vector.load %arg3[%c0_9, %c0_10, %c0_11] : memref<1x1x1xf32, #tpu.memory_space<vmem>>, vector<1x1x1xf32>
    tpu.vector_store %arg3[%c0_9, %c0_10, %c0_11], %34 {strides = array<i32>} : memref<1x1x1xf32, #tpu.memory_space<vmem>>, vector<1x1x1xf32>,
    %36 = arith.extui %26 : vector<1x256xi1> to vector<1x256xi32>
    %37 = arith.sitofp %36 : vector<1x256xi32> to vector<1x256xf32>
    %38 = vector.shape_cast %37 : vector<1x256xf32> to vector<1x1x256xf32>
    %cst_12 = arith.constant dense<0.000000e+00> : vector<1xf32>
    %39 = vector.multi_reduction <add>, %38, %cst_12 [1, 2] : vector<1x1x256xf32> to vector<1xf32>
    %40 = vector.shape_cast %39 : vector<1xf32> to vector<1x1x1xf32>
    %41 = vector.extract %40[0, 0, 0] : f32 from vector<1x1x1xf32>
    %42 = vector.broadcast %41 : f32 to vector<1x1x1xf32>
    %c0_13 = arith.constant 0 : index
    %c0_14 = arith.constant 0 : index
    %c0_15 = arith.constant 0 : index
    %43 = vector.load %arg4[%c0_13, %c0_14, %c0_15] : memref<1x1x1xf32, #tpu.memory_space<vmem>>, vector<1x1x1xf32>
    tpu.vector_store %arg4[%c0_13, %c0_14, %c0_15], %42 {strides = array<i32>} : memref<1x1x1xf32, #tpu.memory_space<vmem>>, vector<1x1x1xf32>,
    return
  }
  func.func @transform_0(%arg0: i32) -> (i32, i32) {
    %c0_i32 = arith.constant 0 : i32
    %c0_i32_0 = arith.constant 0 : i32
    return %c0_i32, %arg0 : i32, i32
  }
  func.func @transform_1(%arg0: i32) -> (i32, i32) {
    %c0_i32 = arith.constant 0 : i32
    %c0_i32_0 = arith.constant 0 : i32
    return %c0_i32, %arg0 : i32, i32
  }
  func.func @transform_2(%arg0: i32) -> (i32, i32, i32) {
    %c0_i32 = arith.constant 0 : i32
    %c0_i32_0 = arith.constant 0 : i32
    %c0_i32_1 = arith.constant 0 : i32
    return %arg0, %c0_i32, %c0_i32_0 : i32, i32, i32
  }
  func.func @transform_3(%arg0: i32) -> (i32, i32, i32) {
    %c0_i32 = arith.constant 0 : i32
    %c0_i32_0 = arith.constant 0 : i32
    %c0_i32_1 = arith.constant 0 : i32
    return %arg0, %c0_i32, %c0_i32_0 : i32, i32, i32
  }
}

</mosaic_0001>

<llo_original>
// kernel: tpu_custom_call.1
$region0: #{tpu_custom_call.1}
  #allocation0 [shape = 'u32[]', space=smem, size = 0x4, offset = 0x4, fixed_abs, tag = 'smem constant byte address 0x4 - core index']
  #allocation1 [shape = 'u32[72,128]{1,0:T(1,128)}', space=vmem, size = 0x9000, scoped, tag = 'internal scratch']
  %s0 = inlined_call_operand.hbm [shape: f32[8,256], index: 0, kind: input, shape index: {}]
  %s1 = inlined_call_operand.hbm [shape: s32[1,256], index: 1, kind: input, shape index: {}]
  %s2 = inlined_call_operand.hbm [shape: f32[1,1,1], index: 2, kind: output, shape index: {0}]
  %s3 = inlined_call_operand.hbm [shape: f32[1,1,1], index: 3, kind: output, shape index: {1}]
  %4 = xla_tuple %s2, %s3
  %s5 = sld [smem:[#allocation0]]
  $region34: #{tpu_custom_call.1} parent=0
    _
  %s7 = ssub.s32 1, %s5
  %s8 = scalar_select 0, %s7, %s5
  $region1: #{tpu_custom_call.1} parent=0
    #allocation2 [shape = 'u8[8192]{0}', space=vmem, size = 0x2000, scoped, tag = 'input window, operand 0, single buffered']
    #allocation3 [shape = 's32[1]{0}', space=sflag, size = 0x4, scoped, tag = 'scoped memory for tpu_custom_call.1']
    #allocation4 [shape = 's32[1]{0}', space=sflag, size = 0x4, scoped, tag = 'scoped memory for tpu_custom_call.1']
    #allocation5 [shape = 'u8[1024]{0}', space=vmem, size = 0x400, scoped, tag = 'input window, operand 1, single buffered']
    #allocation6 [shape = 's32[1]{0}', space=sflag, size = 0x4, scoped, tag = 'scoped memory for tpu_custom_call.1']
    #allocation7 [shape = 'u8[512]{0}', space=vmem, size = 0x400, scoped, tag = 'output window, operand 0, single buffered']
    #allocation8 [shape = 'u8[512]{0}', space=vmem, size = 0x400, scoped, tag = 'output window, operand 1, single buffered']
    #allocation9 [shape = 's32[1]{0}', space=sflag, size = 0x4, scoped, tag = 'scoped memory for tpu_custom_call.1']
    %9 = vsyncpa [#allocation3], 0
    %10 = vsyncpa [#allocation6], 0
    %11 = vsyncpa [#allocation4], 0
    %12 = vsyncpa [#allocation9], 0
    // Predicated region
    $region2: #{tpu_custom_call.1} parent=1 // pred_check
      _
    $region3: #{tpu_custom_call.1} parent=1 // pred_check_branch
      %14 = sbr.rel (0) target = $region5
    $region4: #{tpu_custom_call.1} parent=1 // pred_region
      %16 = vsyncadd [#allocation3], 0
      %s18 = sshll.u32 %s0, 4
      %s19 = int_to_ptr.hbm [resolvable:$true] %s18
      %s20 = sshll.u32 [#allocation2], 4
      %s21 = int_to_ptr.vmem [resolvable:$true] %s20
      %23 = dma.hbm_to_vmem [thread:$0]  %s19, 256, %s21, [#allocation3]
    $region5: #{tpu_custom_call.1} parent=1 // pred_fallthru
      _
    // Predicated region
    $region6: #{tpu_custom_call.1} parent=1 // pred_check
      _
    $region7: #{tpu_custom_call.1} parent=1 // pred_check_branch
      %25 = sbr.rel (0) target = $region9
    $region8: #{tpu_custom_call.1} parent=1 // pred_region
      %27 = vsyncadd [#allocation6], 0
      %s29 = sshll.u32 %s1, 4
      %s30 = int_to_ptr.hbm [resolvable:$true] %s29
      %s31 = sshll.u32 [#allocation5], 4
      %s32 = int_to_ptr.vmem [resolvable:$true] %s31
      %34 = dma.hbm_to_vmem [thread:$0]  %s30, 32, %s32, [#allocation6]
    $region9: #{tpu_custom_call.1} parent=1 // pred_fallthru
      _
    // Predicated region
    $region10: #{tpu_custom_call.1} parent=1 // pred_check
      _
    $region11: #{tpu_custom_call.1} parent=1 // pred_check_branch
      %36 = sbr.rel (0) target = $region13
    $region12: #{tpu_custom_call.1} parent=1 // pred_region
      %38 = dma.done [#allocation3], 256
    $region13: #{tpu_custom_call.1} parent=1 // pred_fallthru
      _
    // Predicated region
    $region14: #{tpu_custom_call.1} parent=1 // pred_check
      _
    $region15: #{tpu_custom_call.1} parent=1 // pred_check_branch
      %40 = sbr.rel (0) target = $region17
    $region16: #{tpu_custom_call.1} parent=1 // pred_region
      %42 = dma.done [#allocation6], 32
    $region17: #{tpu_custom_call.1} parent=1 // pred_fallthru
      _
    %v43 = vld [vmem:[#allocation2] sm:$0xff]
    %v44 = vld [vmem:[#allocation2 + $0x8] sm:$0xff]
    %v45 = vld [vmem:[#allocation5] sm:$0x3]
    %v46 = vrot.slane %v43, 4
    %v47 = vmax.f32 %v43, %v46
    %v48 = vrot.slane %v47, 2
    %v49 = vmax.f32 %v47, %v48
    %v50 = vrot.slane %v49, 1
    %v51 = vmax.f32 %v49, %v50
    %v52 = vrot.slane %v44, 4
    %v53 = vmax.f32 %v44, %v52
    %v54 = vrot.slane %v53, 2
    %v55 = vmax.f32 %v53, %v54
    %v56 = vrot.slane %v55, 1
    %v57 = vmax.f32 %v55, %v56
    %v58 = vsub.f32 %v43, %v51
    %v59 = vsub.f32 %v44, %v57
    %v60 = vmul.f32 %v58, 1.442695
    %v61 = vpow.pop %v60
    %v62 = vmul.f32 %v59, 1.442695
    %v63 = vpow.pop %v62
    %v64 = vrot.slane %v61, 4
    %v65 = vadd.f32 %v61, %v64
    %v66 = vrot.slane %v65, 2
    %v67 = vadd.f32 %v65, %v66
    %v68 = vrot.slane %v67, 1
    %v69 = vadd.f32 %v67, %v68
    %v70 = vrot.slane %v63, 4
    %v71 = vadd.f32 %v63, %v70
    %v72 = vrot.slane %v71, 2
    %v73 = vadd.f32 %v71, %v72
    %v74 = vrot.slane %v73, 1
    %v75 = vadd.f32 %v73, %v74
    %v76 = vlog2.pop %v69
    %v77 = vmul.f32 %v76, 0.6931472
    %v78 = vlog2.pop %v75
    %v79 = vmul.f32 %v78, 0.6931472
    %v80 = vadd.f32 %v51, %v77
    %v81 = vadd.f32 %v57, %v79
    %v82 = vlaneseq
    %v83 = vshrl.u32 %v82, 7
    %v84 = vperm.slane %v45, 0
    %v85 = vperm.slane %v45, 1
    %vm86 = vcmp.eq.s32.totalorder %v83, %v84
    %vm87 = vcmp.eq.s32.totalorder %v83, %v85
    %v88 = vsel %vm86, %v43, 0.0
    %v89 = vsel %vm87, %v44, 0.0
    %v90 = vrot.slane %v88, 4
    %v91 = vadd.f32 %v88, %v90
    %v92 = vrot.slane %v91, 2
    %v93 = vadd.f32 %v91, %v92
    %v94 = vrot.slane %v93, 1
    %v95 = vadd.f32 %v93, %v94
    %v96 = vrot.slane %v89, 4
    %v97 = vadd.f32 %v89, %v96
    %v98 = vrot.slane %v97, 2
    %v99 = vadd.f32 %v97, %v98
    %v100 = vrot.slane %v99, 1
    %v101 = vadd.f32 %v99, %v100
    %s102 = smul.u32 0, 256
    %v103 = vlaneseq
    %v104 = vand.u32 %v103, 127
    %v105 = vadd.s32 %v104, 128
    %v106 = vstv %s102
    %v107 = vadd.s32 %v106, %v104
    %v108 = vadd.s32 %v106, %v105
    %vm109 = vcmp.lt.s32.totalorder %v107, 256
    %vm110 = vcmp.lt.s32.totalorder %v108, 256
    %vm111 = vcmp.ne.s32.totalorder %v45, 4294967196
    %v112 = vsel %vm111, 1, 0
    %v113 = vperm.slane %v112, 0
    %v114 = vperm.slane %v112, 1
    %vm115 = vcmp.ne.s32.totalorder %v113, 0
    %vm116 = vcmp.ne.s32.totalorder %v114, 0
    %vm117 = vmand %vm109, %vm115
    %vm118 = vmand %vm110, %vm116
    %v119 = vsub.f32 %v80, %v95
    %v120 = vsub.f32 %v81, %v101
    %v121 = vsel %vm117, %v119, 0.0
    %v122 = vsel %vm118, %v120, 0.0
    %vm123 = vcmask 1040384
    %v124 = vsel %vm123, %v121, 0.0
    %v125 = vsel %vm123, %v122, 0.0
    %v126 = vadd.f32 %v124, %v125
    %127 = vadd.xlane.f32.xlu0 %v126
    %v128 = vpop.xlane.xlu0 %127
    %v129 = vrot.slane %v128, 4
    %v130 = vadd.f32 %v128, %v129
    %v131 = vrot.slane %v130, 2
    %v132 = vadd.f32 %v130, %v131
    %v133 = vrot.slane %v132, 1
    %v134 = vadd.f32 %v132, %v133
    %s135 = vtos %v134
    %v136 = vstv %s135
    %vm137 = vcmask 0
    %138 = vst.msk [vmem:[#allocation7] sm:$0x1] %vm137, %v136
    %v139 = vsel %vm117, 1, 0
    %v140 = vsel %vm118, 1, 0
    %v141 = vcvt.s32.f32 %v139
    %v142 = vcvt.s32.f32 %v140
    %v143 = vsel %vm123, %v141, 0.0
    %v144 = vsel %vm123, %v142, 0.0
    %v145 = vadd.f32 %v143, %v144
    %146 = vadd.xlane.f32.xlu0 %v145
    %v147 = vpop.xlane.xlu0 %146
    %v148 = vrot.slane %v147, 4
    %v149 = vadd.f32 %v147, %v148
    %v150 = vrot.slane %v149, 2
    %v151 = vadd.f32 %v149, %v150
    %v152 = vrot.slane %v151, 1
    %v153 = vadd.f32 %v151, %v152
    %s154 = vtos %v153
    %v155 = vstv %s154
    %156 = vst.msk [vmem:[#allocation8] sm:$0x1] %vm137, %v155
    // Predicated region
    $region18: #{tpu_custom_call.1} parent=1 // pred_check
      _
    $region19: #{tpu_custom_call.1} parent=1 // pred_check_branch
      %158 = sbr.rel (0) target = $region21
    $region20: #{tpu_custom_call.1} parent=1 // pred_region
      %160 = vsyncadd [#allocation4], 0
      %s162 = sshll.u32 [#allocation7], 4
      %s163 = int_to_ptr.vmem [resolvable:$true] %s162
      %s164 = sshll.u32 %s2, 4
      %s165 = int_to_ptr.hbm [resolvable:$true] %s164
      %167 = dma.vmem_to_hbm [thread:$0]  %s163, 16, %s165, [#allocation4]
    $region21: #{tpu_custom_call.1} parent=1 // pred_fallthru
      _
    // Predicated region
    $region22: #{tpu_custom_call.1} parent=1 // pred_check
      _
    $region23: #{tpu_custom_call.1} parent=1 // pred_check_branch
      %169 = sbr.rel (0) target = $region25
    $region24: #{tpu_custom_call.1} parent=1 // pred_region
      %171 = vsyncadd [#allocation9], 0
      %s173 = sshll.u32 [#allocation8], 4
      %s174 = int_to_ptr.vmem [resolvable:$true] %s173
      %s175 = sshll.u32 %s3, 4
      %s176 = int_to_ptr.hbm [resolvable:$true] %s175
      %178 = dma.vmem_to_hbm [thread:$0]  %s174, 16, %s176, [#allocation9]
    $region25: #{tpu_custom_call.1} parent=1 // pred_fallthru
      _
    // Predicated region
    $region26: #{tpu_custom_call.1} parent=1 // pred_check
      _
    $region27: #{tpu_custom_call.1} parent=1 // pred_check_branch
      %180 = sbr.rel (0) target = $region29
    $region28: #{tpu_custom_call.1} parent=1 // pred_region
      %182 = dma.done [#allocation4], 16
    $region29: #{tpu_custom_call.1} parent=1 // pred_fallthru
      _
    // Predicated region
    $region30: #{tpu_custom_call.1} parent=1 // pred_check
      _
    $region31: #{tpu_custom_call.1} parent=1 // pred_check_branch
      %184 = sbr.rel (0) target = $region33
    $region32: #{tpu_custom_call.1} parent=1 // pred_region
      %186 = dma.done [#allocation9], 16
    $region33: #{tpu_custom_call.1} parent=1 // pred_fallthru
      _
    %187 = vsyncpa [#allocation3], 1
    %188 = vsyncpa [#allocation6], 1
    %189 = vsyncpa [#allocation4], 1
    %190 = vsyncpa [#allocation9], 1

</llo_original>
